<compile_context>
chip_gen: v6e
topology: v6e:2x2x1
jax: 0.10.0
libtpu: 0.0.40
codegen_flags: <defaults>
</compile_context>

<pallas_src>
import jax
import jax.numpy as jnp
import numpy as np
from jax.experimental import pallas as pl
from jax.experimental.pallas import tpu as pltpu

LANE = 128        # vreg lane width: hidden feature dims are padded to this
SUBLANE_F32 = 8   # f32 sublane count: batch tiles are multiples of this


def _round_up(x, m):
    return (x + m - 1) // m * m


def _ddpg_kernel(x_ref, w1_ref, b1_ref, w2_ref, b2_ref, w3_ref, b3_ref, o_ref):
    # Pure-f32 path (module semantics); f32 accumulation on the MXU.
    h1 = jnp.dot(x_ref[...], w1_ref[...], preferred_element_type=jnp.float32)
    h1 = jnp.maximum(h1 + b1_ref[...], 0.0)
    h2 = jnp.dot(h1, w2_ref[...], preferred_element_type=jnp.float32)
    h2 = jnp.maximum(h2 + b2_ref[...], 0.0)
    out = jnp.dot(h2, w3_ref[...], preferred_element_type=jnp.float32)
    o_ref[...] = (out + b3_ref[...]).astype(o_ref.dtype)


def init_params(key, input_dims, fc1_dims, fc2_dims, output_dims):
    """f32 params at the module's logical shapes.
    Weights: Xavier-uniform (as in the module). Biases: PyTorch Linear default
    uniform(-1/sqrt(fan_in), 1/sqrt(fan_in)), stored (1, out) for broadcast."""
    ks = jax.random.split(key, 6)

    def xavier(k, fan_in, fan_out):
        limit = float(np.sqrt(6.0 / (fan_in + fan_out)))
        return jax.random.uniform(k, (fan_in, fan_out), jnp.float32, -limit, limit)

    def bias(k, fan_in, fan_out):
        bound = 1.0 / float(np.sqrt(fan_in))
        return jax.random.uniform(k, (1, fan_out), jnp.float32, -bound, bound)

    return {
        "w1": xavier(ks[0], input_dims, fc1_dims),
        "b1": bias(ks[1], input_dims, fc1_dims),
        "w2": xavier(ks[2], fc1_dims, fc2_dims),
        "b2": bias(ks[3], fc1_dims, fc2_dims),
        "w3": xavier(ks[4], fc2_dims, output_dims),
        "b3": bias(ks[5], fc2_dims, output_dims),
    }


def prepare_params(params):
    """One-time zero-padding of the HIDDEN dims only to the 128-lane width.
    Input and output dims stay logical (x is streamed raw, output is narrow).
    Zero padding is exact: relu(0) = 0 feeds zero-padded rows of the next
    weight, contributing nothing."""
    def pad2(a, rows, cols):
        out = jnp.zeros((rows, cols), jnp.float32)
        return out.at[: a.shape[0], : a.shape[1]].set(a.astype(jnp.float32))

    in_d, h1_d = params["w1"].shape
    h2_d = params["w2"].shape[1]
    out_d = params["w3"].shape[1]
    h1_p = _round_up(h1_d, LANE)
    h2_p = _round_up(h2_d, LANE)
    return {
        "w1": pad2(params["w1"], in_d, h1_p),   # pad output dim only
        "b1": pad2(params["b1"], 1, h1_p),
        "w2": pad2(params["w2"], h1_p, h2_p),
        "b2": pad2(params["b2"], 1, h2_p),
        "w3": pad2(params["w3"], h2_p, out_d),  # pad input dim only
        "b3": pad2(params["b3"], 1, out_d),
        "dims": (in_d, h1_d, h2_d, out_d),      # logical (unpadded) dims
    }


def _pick_tile_b(B, *, max_tile=1024, min_grid_steps=2):
    """Batch tile: >= min_grid_steps grid steps when B allows (v7x has 2 TCs
    and the batch axis is the only thing sharding across them), capped at 1024
    rows (keeps intermediates small; ~85% of HBM roofline on v5e/v6e streaming
    sweeps), rounded to the f32 sublane count."""
    t = max(pl.cdiv(B, min_grid_steps), SUBLANE_F32)
    t = _round_up(t, SUBLANE_F32)
    return int(min(t, max_tile))


def ddpg_forward(x, prepared, *, tile_b=None):
    """x: (B, input_dims) f32. prepared: output of prepare_params."""
    in_d, h1_d, h2_d, out_d = prepared["dims"]
    w1, b1, w2, b2, w3, b3 = (prepared[k] for k in ("w1", "b1", "w2", "b2", "w3", "b3"))
    h1_p, h2_p = w1.shape[1], w2.shape[1]

    B = x.shape[0]
    assert x.shape[1] == in_d, "x feature dim must match input_dims"
    x = x.astype(jnp.float32)

    if tile_b is None:
        tile_b = _pick_tile_b(B)
    else:
        tile_b = max(SUBLANE_F32,
                     _round_up(min(tile_b, _round_up(B, SUBLANE_F32)), SUBLANE_F32))
    b_pad = _round_up(B, tile_b)
    grid = (b_pad // tile_b,)

    # Batch-only padding (no feature-dim padding / dtype pass in the wrapper).
    if b_pad != B:
        x = jnp.zeros((b_pad, in_d), jnp.float32).at[:B].set(x)

    # Honest per-tile VMEM estimate: double-buffered x/out blocks, resident
    # weights/biases (x2 for buffering slack), f32 intermediates h1/h2.
    w_bytes = 4 * (in_d * h1_p + h1_p * h2_p + h2_p * out_d + h1_p + h2_p + out_d)
    vmem_est = (2 * tile_b * (in_d + out_d) * 4
                + 2 * w_bytes
                + tile_b * (h1_p + h2_p) * 4)
    try:
        vmem_cap = int(pltpu.get_tpu_info().vmem_capacity_bytes)
    except Exception:
        vmem_cap = 64 << 20  # conservative (v7x per-TC VMEM)
    vmem_limit = int(min(max(2 * vmem_est, 16 << 20), int(0.75 * vmem_cap)))

    flops = 2 * b_pad * (in_d * h1_p + h1_p * h2_p + h2_p * out_d)
    bytes_accessed = b_pad * in_d * 4 + w_bytes + b_pad * out_d * 4

    resident = lambda a: pl.BlockSpec(a.shape, lambda i: (0, 0))

    out = pl.pallas_call(
        _ddpg_kernel,
        out_shape=jax.ShapeDtypeStruct((b_pad, out_d), jnp.float32),
        grid=grid,
        in_specs=[
            # x streamed at logical width (full last-dim block is legal).
            pl.BlockSpec((tile_b, in_d), lambda i: (i, 0)),
            resident(w1), resident(b1),        # weights/biases VMEM-resident
            resident(w2), resident(b2),
            resident(w3), resident(b3),
        ],
        # Narrow output block: only useful bytes go back to HBM.
        out_specs=pl.BlockSpec((tile_b, out_d), lambda i: (i, 0)),
        compiler_params=pltpu.CompilerParams(
            dimension_semantics=("parallel",),   # megacore-shardable batch axis
            vmem_limit_bytes=vmem_limit,
        ),
        cost_estimate=pl.CostEstimate(
            flops=flops, transcendentals=0, bytes_accessed=bytes_accessed),
    )(x, w1, b1, w2, b2, w3, b3)

    return out[:B] if b_pad != B else out


def ddpg_reference_f32(x, params):
    """Pure-f32 numpy reference matching the PyTorch module semantics."""
    x = np.asarray(x, np.float32)
    w1, b1 = np.asarray(params["w1"]), np.asarray(params["b1"])
    w2, b2 = np.asarray(params["w2"]), np.asarray(params["b2"])
    w3, b3 = np.asarray(params["w3"]), np.asarray(params["b3"])
    h1 = np.maximum(x @ w1 + b1, 0.0)
    h2 = np.maximum(h1 @ w2 + b2, 0.0)
    return h2 @ w3 + b3


if __name__ == "__main__":
    # Small shapes consistent with the module's forward.
    batch, input_dims, fc1_dims, fc2_dims, output_dims = 8, 16, 64, 64, 4

    key = jax.random.PRNGKey(0)
    k_x, k_p = jax.random.split(key)
    x = jax.random.normal(k_x, (batch, input_dims), jnp.float32)

    params = init_params(k_p, input_dims, fc1_dims, fc2_dims, output_dims)
    prepared = prepare_params(params)

    out = ddpg_forward(x, prepared)
    out = jax.block_until_ready(out)
    assert out.shape == (batch, output_dims)

    ref = ddpg_reference_f32(np.asarray(x), params)
    np.testing.assert_allclose(np.asarray(out), ref, rtol=1e-2, atol=1e-2)

    print("KERNEL_OK")
</pallas_src>

<mosaic_0001>
module attributes {stable_mosaic.version = 11 : i64} {
  func.func @_ddpg_kernel(%arg0: i32, %arg1: memref<8x16xf32, #tpu.memory_space<vmem>>, %arg2: memref<16x128xf32, #tpu.memory_space<vmem>>, %arg3: memref<1x128xf32, #tpu.memory_space<vmem>>, %arg4: memref<128x128xf32, #tpu.memory_space<vmem>>, %arg5: memref<1x128xf32, #tpu.memory_space<vmem>>, %arg6: memref<128x4xf32, #tpu.memory_space<vmem>>, %arg7: memref<1x4xf32, #tpu.memory_space<vmem>>, %arg8: memref<8x4xf32, #tpu.memory_space<vmem>>) attributes {dimension_semantics = [#tpu.dimension_semantics<parallel>], iteration_bounds = array<i64: 1>, scalar_prefetch = 0 : i64, scratch_operands = 0 : i64, tpu.core_type = #tpu.core_type<tc>, window_params = [{transform_indices = @transform_0, window_bounds = array<i64: 8, 16>}, {pipeline_mode = #tpu.pipeline_mode<synchronous>, transform_indices = @transform_1, window_bounds = array<i64: 16, 128>}, {pipeline_mode = #tpu.pipeline_mode<synchronous>, transform_indices = @transform_2, window_bounds = array<i64: 1, 128>}, {pipeline_mode = #tpu.pipeline_mode<synchronous>, transform_indices = @transform_3, window_bounds = array<i64: 128, 128>}, {pipeline_mode = #tpu.pipeline_mode<synchronous>, transform_indices = @transform_4, window_bounds = array<i64: 1, 128>}, {pipeline_mode = #tpu.pipeline_mode<synchronous>, transform_indices = @transform_5, window_bounds = array<i64: 128, 4>}, {pipeline_mode = #tpu.pipeline_mode<synchronous>, transform_indices = @transform_6, window_bounds = array<i64: 1, 4>}, {transform_indices = @transform_7, window_bounds = array<i64: 8, 4>}]} {
    %c0 = arith.constant 0 : index
    %c0_0 = arith.constant 0 : index
    %0 = vector.load %arg1[%c0, %c0_0] : memref<8x16xf32, #tpu.memory_space<vmem>>, vector<8x16xf32>
    %c0_1 = arith.constant 0 : index
    %c0_2 = arith.constant 0 : index
    %1 = vector.load %arg2[%c0_1, %c0_2] : memref<16x128xf32, #tpu.memory_space<vmem>>, vector<16x128xf32>
    %cst = arith.constant dense<0.000000e+00> : vector<8x128xf32>
    %2 = tpu.matmul %0, %1, %cst {dimension_numbers = #tpu.dot_dimension_numbers<[1], [0], [0], [1], [0, 0, 1, 1], [], []>} : vector<8x16xf32>, vector<16x128xf32>, vector<8x128xf32> -> vector<8x128xf32>
    %c0_3 = arith.constant 0 : index
    %c0_4 = arith.constant 0 : index
    %3 = vector.load %arg3[%c0_3, %c0_4] : memref<1x128xf32, #tpu.memory_space<vmem>>, vector<1x128xf32>
    %4 = vector.broadcast %3 : vector<1x128xf32> to vector<8x128xf32>
    %5 = arith.addf %2, %4 : vector<8x128xf32>
    %cst_5 = arith.constant 0.000000e+00 : f32
    %6 = vector.broadcast %cst_5 : f32 to vector<8x128xf32>
    %7 = arith.maximumf %5, %6 : vector<8x128xf32>
    %c0_6 = arith.constant 0 : index
    %c0_7 = arith.constant 0 : index
    %8 = vector.load %arg4[%c0_6, %c0_7] : memref<128x128xf32, #tpu.memory_space<vmem>>, vector<128x128xf32>
    %cst_8 = arith.constant dense<0.000000e+00> : vector<8x128xf32>
    %9 = tpu.matmul %7, %8, %cst_8 {dimension_numbers = #tpu.dot_dimension_numbers<[1], [0], [0], [1], [0, 0, 1, 1], [], []>} : vector<8x128xf32>, vector<128x128xf32>, vector<8x128xf32> -> vector<8x128xf32>
    %c0_9 = arith.constant 0 : index
    %c0_10 = arith.constant 0 : index
    %10 = vector.load %arg5[%c0_9, %c0_10] : memref<1x128xf32, #tpu.memory_space<vmem>>, vector<1x128xf32>
    %11 = vector.broadcast %10 : vector<1x128xf32> to vector<8x128xf32>
    %12 = arith.addf %9, %11 : vector<8x128xf32>
    %cst_11 = arith.constant 0.000000e+00 : f32
    %13 = vector.broadcast %cst_11 : f32 to vector<8x128xf32>
    %14 = arith.maximumf %12, %13 : vector<8x128xf32>
    %c0_12 = arith.constant 0 : index
    %c0_13 = arith.constant 0 : index
    %15 = vector.load %arg6[%c0_12, %c0_13] : memref<128x4xf32, #tpu.memory_space<vmem>>, vector<128x4xf32>
    %cst_14 = arith.constant dense<0.000000e+00> : vector<8x4xf32>
    %16 = tpu.matmul %14, %15, %cst_14 {dimension_numbers = #tpu.dot_dimension_numbers<[1], [0], [0], [1], [0, 0, 1, 1], [], []>} : vector<8x128xf32>, vector<128x4xf32>, vector<8x4xf32> -> vector<8x4xf32>
    %c0_15 = arith.constant 0 : index
    %c0_16 = arith.constant 0 : index
    %17 = vector.load %arg7[%c0_15, %c0_16] : memref<1x4xf32, #tpu.memory_space<vmem>>, vector<1x4xf32>
    %18 = vector.broadcast %17 : vector<1x4xf32> to vector<8x4xf32>
    %19 = arith.addf %16, %18 : vector<8x4xf32>
    %c0_17 = arith.constant 0 : index
    %c0_18 = arith.constant 0 : index
    %20 = vector.load %arg8[%c0_17, %c0_18] : memref<8x4xf32, #tpu.memory_space<vmem>>, vector<8x4xf32>
    tpu.vector_store %arg8[%c0_17, %c0_18], %19 {strides = array<i32>} : memref<8x4xf32, #tpu.memory_space<vmem>>, vector<8x4xf32>,
    return
  }
  func.func @transform_0(%arg0: i32) -> (i32, i32) {
    %c0_i32 = arith.constant 0 : i32
    %c0_i32_0 = arith.constant 0 : i32
    return %arg0, %c0_i32 : i32, i32
  }
  func.func @transform_1(%arg0: i32) -> (i32, i32) {
    %c0_i32 = arith.constant 0 : i32
    %c0_i32_0 = arith.constant 0 : i32
    %c0_i32_1 = arith.constant 0 : i32
    return %c0_i32, %c0_i32_0 : i32, i32
  }
  func.func @transform_2(%arg0: i32) -> (i32, i32) {
    %c0_i32 = arith.constant 0 : i32
    %c0_i32_0 = arith.constant 0 : i32
    %c0_i32_1 = arith.constant 0 : i32
    return %c0_i32, %c0_i32_0 : i32, i32
  }
  func.func @transform_3(%arg0: i32) -> (i32, i32) {
    %c0_i32 = arith.constant 0 : i32
    %c0_i32_0 = arith.constant 0 : i32
    %c0_i32_1 = arith.constant 0 : i32
    return %c0_i32, %c0_i32_0 : i32, i32
  }
  func.func @transform_4(%arg0: i32) -> (i32, i32) {
    %c0_i32 = arith.constant 0 : i32
    %c0_i32_0 = arith.constant 0 : i32
    %c0_i32_1 = arith.constant 0 : i32
    return %c0_i32, %c0_i32_0 : i32, i32
  }
  func.func @transform_5(%arg0: i32) -> (i32, i32) {
    %c0_i32 = arith.constant 0 : i32
    %c0_i32_0 = arith.constant 0 : i32
    %c0_i32_1 = arith.constant 0 : i32
    return %c0_i32, %c0_i32_0 : i32, i32
  }
  func.func @transform_6(%arg0: i32) -> (i32, i32) {
    %c0_i32 = arith.constant 0 : i32
    %c0_i32_0 = arith.constant 0 : i32
    %c0_i32_1 = arith.constant 0 : i32
    return %c0_i32, %c0_i32_0 : i32, i32
  }
  func.func @transform_7(%arg0: i32) -> (i32, i32) {
    %c0_i32 = arith.constant 0 : i32
    %c0_i32_0 = arith.constant 0 : i32
    return %arg0, %c0_i32 : i32, i32
  }
}

</mosaic_0001>

<llo_original>
// kernel: tpu_custom_call.1
$region0: #{tpu_custom_call.1}
  #allocation0 [shape = 'u32[]', space=smem, size = 0x4, offset = 0x4, fixed_abs, tag = 'smem constant byte address 0x4 - core index']
  #allocation1 [shape = 'u32[144,128]{1,0:T(1,128)}', space=vmem, size = 0x12000, scoped, tag = 'internal scratch']
  %s0 = inlined_call_operand.vmem [shape: f32[8,16], index: 0, kind: input, shape index: {}]
  %s1 = inlined_call_operand.hbm [shape: f32[16,128], index: 1, kind: input, shape index: {}]
  %s2 = inlined_call_operand.vmem [shape: f32[1,128], index: 2, kind: input, shape index: {}]
  %s3 = inlined_call_operand.vmem [shape: f32[128,128], index: 3, kind: input, shape index: {}]
  %s4 = inlined_call_operand.hbm [shape: f32[1,128], index: 4, kind: input, shape index: {}]
  %s5 = inlined_call_operand.vmem [shape: f32[128,4], index: 5, kind: input, shape index: {}]
  %s6 = inlined_call_operand.vmem [shape: f32[1,4], index: 6, kind: input, shape index: {}]
  %s7 = inlined_call_operand.vmem [shape: f32[8,4], index: 7, kind: output, shape index: {}]
  %s8 = sld [smem:[#allocation0]]
  $region46: #{tpu_custom_call.1} parent=0
    _
  %s10 = ssub.s32 1, %s8
  %s11 = scalar_select 0, %s10, %s8
  $region1: #{tpu_custom_call.1} parent=0
    #allocation2 [shape = 'u8[8192]{0}', space=vmem, size = 0x2000, scoped, tag = 'input window, operand 1, single buffered']
    #allocation3 [shape = 's32[1]{0}', space=sflag, size = 0x4, scoped, tag = 'scoped memory for tpu_custom_call.1']
    #allocation4 [shape = 'u8[512]{0}', space=vmem, size = 0x400, scoped, tag = 'input window, operand 4, single buffered']
    #allocation5 [shape = 's32[1]{0}', space=sflag, size = 0x4, scoped, tag = 'scoped memory for tpu_custom_call.1']
    %12 = vsyncpa [#allocation3], 0
    %13 = vsyncpa [#allocation5], 0
    // Predicated region
    $region2: #{tpu_custom_call.1} parent=1 // pred_check
      _
    $region3: #{tpu_custom_call.1} parent=1 // pred_check_branch
      %15 = sbr.rel (0) target = $region5
    $region4: #{tpu_custom_call.1} parent=1 // pred_region
      _
    $region5: #{tpu_custom_call.1} parent=1 // pred_fallthru
      _
    // Predicated region
    $region6: #{tpu_custom_call.1} parent=1 // pred_check
      _
    $region7: #{tpu_custom_call.1} parent=1 // pred_check_branch
      %17 = sbr.rel (0) target = $region9
    $region8: #{tpu_custom_call.1} parent=1 // pred_region
      %s19 = ssub.s32 256, 256
      %20 = vsyncadd [#allocation3], %s19
      %s21 = sshll.u32 [#allocation2], 4
      %s22 = int_to_ptr.vmem [resolvable:$true] %s21
      %27 = dma.hbm_to_vmem [thread:$0]  %s1, 256, %s22, [#allocation3], 128, 128, 8
    $region9: #{tpu_custom_call.1} parent=1 // pred_fallthru
      _
    // Predicated region
    $region10: #{tpu_custom_call.1} parent=1 // pred_check
      _
    $region11: #{tpu_custom_call.1} parent=1 // pred_check_branch
      %29 = sbr.rel (0) target = $region13
    $region12: #{tpu_custom_call.1} parent=1 // pred_region
      _
    $region13: #{tpu_custom_call.1} parent=1 // pred_fallthru
      _
    // Predicated region
    $region14: #{tpu_custom_call.1} parent=1 // pred_check
      _
    $region15: #{tpu_custom_call.1} parent=1 // pred_check_branch
      %31 = sbr.rel (0) target = $region17
    $region16: #{tpu_custom_call.1} parent=1 // pred_region
      _
    $region17: #{tpu_custom_call.1} parent=1 // pred_fallthru
      _
    // Predicated region
    $region18: #{tpu_custom_call.1} parent=1 // pred_check
      _
    $region19: #{tpu_custom_call.1} parent=1 // pred_check_branch
      %33 = sbr.rel (0) target = $region21
    $region20: #{tpu_custom_call.1} parent=1 // pred_region
      %s35 = ssub.s32 16, 16
      %36 = vsyncadd [#allocation5], %s35
      %s38 = sshll.u32 [#allocation4], 4
      %s39 = int_to_ptr.vmem [resolvable:$true] %s38
      %41 = dma.hbm_to_vmem [thread:$0]  %s4, 16, %s39, [#allocation5]
    $region21: #{tpu_custom_call.1} parent=1 // pred_fallthru
      _
    // Predicated region
    $region22: #{tpu_custom_call.1} parent=1 // pred_check
      _
    $region23: #{tpu_custom_call.1} parent=1 // pred_check_branch
      %43 = sbr.rel (0) target = $region25
    $region24: #{tpu_custom_call.1} parent=1 // pred_region
      _
    $region25: #{tpu_custom_call.1} parent=1 // pred_fallthru
      _
    // Predicated region
    $region26: #{tpu_custom_call.1} parent=1 // pred_check
      _
    $region27: #{tpu_custom_call.1} parent=1 // pred_check_branch
      %45 = sbr.rel (0) target = $region29
    $region28: #{tpu_custom_call.1} parent=1 // pred_region
      _
    $region29: #{tpu_custom_call.1} parent=1 // pred_fallthru
      _
    // Predicated region
    $region30: #{tpu_custom_call.1} parent=1 // pred_check
      _
    $region31: #{tpu_custom_call.1} parent=1 // pred_check_branch
      %47 = sbr.rel (0) target = $region33
    $region32: #{tpu_custom_call.1} parent=1 // pred_region
      %48 = dma.done [#allocation3], 256
    $region33: #{tpu_custom_call.1} parent=1 // pred_fallthru
      _
    // Predicated region
    $region34: #{tpu_custom_call.1} parent=1 // pred_check
      _
    $region35: #{tpu_custom_call.1} parent=1 // pred_check_branch
      %50 = sbr.rel (0) target = $region37
    $region36: #{tpu_custom_call.1} parent=1 // pred_region
      %51 = dma.done [#allocation5], 16
    $region37: #{tpu_custom_call.1} parent=1 // pred_fallthru
      _
    %v52 = vld [vmem:[%s0] sm:$0xff]
    %v53 = vld [vmem:[#allocation2] sm:$0xff]
    %v54 = vld [vmem:[#allocation2 + $0x8] sm:$0xff]
    %v55 = vld [vmem:[%s2] sm:$0x1]
    %v57 = vlaneseq
    %v58 = vshrl.u32 %v57, 7
    %v59 = vsub.s32 0, %v58
    %v60 = vrot.slane %v55, %v59
    %vm62 = vcmask 130048
    %v64 = vsel %vm62, %v52, 0
    %66 = vmatprep.subr.mxu0 0.0
    %67 = vmatpush1.msra.mxu0 0.0
    %68 = vmatprep.subr.mxu0 0.0
    %69 = vmatpush1.msra.mxu0 0.0
    %70 = vmatprep.subr.mxu0 0.0
    %71 = vmatpush1.msra.mxu0 0.0
    %72 = vmatprep.subr.mxu0 0.0
    %73 = vmatpush1.msra.mxu0 0.0
    %74 = vmatprep.subr.mxu0 0.0
    %75 = vmatpush1.msra.mxu0 0.0
    %76 = vmatprep.subr.mxu0 0.0
    %77 = vmatpush1.msra.mxu0 0.0
    %78 = vmatprep.subr.mxu0 0.0
    %79 = vmatpush1.msra.mxu0 0.0
    %80 = vmatprep.subr.mxu0 0.0
    %81 = vmatpush1.msra.mxu0 0.0
    %82 = vmatprep.subr.mxu0 0.0
    %83 = vmatpush1.msra.mxu0 0.0
    %84 = vmatprep.subr.mxu0 0.0
    %85 = vmatpush1.msra.mxu0 0.0
    %86 = vmatprep.subr.mxu0 0.0
    %87 = vmatpush1.msra.mxu0 0.0
    %88 = vmatprep.subr.mxu0 0.0
    %89 = vmatpush1.msra.mxu0 0.0
    %90 = vmatprep.subr.mxu0 0.0
    %91 = vmatpush1.msra.mxu0 0.0
    %92 = vmatprep.subr.mxu0 0.0
    %93 = vmatpush1.msra.mxu0 0.0
    %94 = vmatprep.subr.mxu0 0.0
    %95 = vmatpush1.msra.mxu0 %v54
    %96 = vmatprep.subr.mxu0 0.0
    %97 = vmatpush1.msra.mxu0 %v53
    %98 = vmatprep.subr.mxu0 0.0
    %99 = vmatpush2.msra.mxu0 0.0
    %100 = vmatprep.subr.mxu0 0.0
    %101 = vmatpush2.msra.mxu0 0.0
    %102 = vmatprep.subr.mxu0 0.0
    %103 = vmatpush2.msra.mxu0 0.0
    %104 = vmatprep.subr.mxu0 0.0
    %105 = vmatpush2.msra.mxu0 0.0
    %106 = vmatprep.subr.mxu0 0.0
    %107 = vmatpush2.msra.mxu0 0.0
    %108 = vmatprep.subr.mxu0 0.0
    %109 = vmatpush2.msra.mxu0 0.0
    %110 = vmatprep.subr.mxu0 0.0
    %111 = vmatpush2.msra.mxu0 0.0
    %112 = vmatprep.subr.mxu0 0.0
    %113 = vmatpush2.msra.mxu0 0.0
    %114 = vmatprep.subr.mxu0 0.0
    %115 = vmatpush2.msra.mxu0 0.0
    %116 = vmatprep.subr.mxu0 0.0
    %117 = vmatpush2.msra.mxu0 0.0
    %118 = vmatprep.subr.mxu0 0.0
    %119 = vmatpush2.msra.mxu0 0.0
    %120 = vmatprep.subr.mxu0 0.0
    %121 = vmatpush2.msra.mxu0 0.0
    %122 = vmatprep.subr.mxu0 0.0
    %123 = vmatpush2.msra.mxu0 0.0
    %124 = vmatprep.subr.mxu0 0.0
    %125 = vmatpush2.msra.mxu0 0.0
    %126 = vmatprep.subr.mxu0 0.0
    %127 = vmatpush2.msra.mxu0 0.0
    %128 = vmatprep.subr.mxu0 0.0
    %129 = vmatpush2.msra.mxu0 0.0
    %130 = vmatprep.mubr.f32.mxu0 0.0
    %131 = vmatmul.mubr.f32.gmra.mxu0 %v64
    %v132 = vpop.f32.mrf.mxu0
    %v133 = vadd.f32 %v60, %v132
    %v134 = vpop.f32.mrf.mxu0
    %135 = vdwg.mxu0
    %v136 = vmax.f32 %v133, 0.0
    %v137 = vld [vmem:[%s3] sm:$0xff]
    %v138 = vld [vmem:[%s3 + $0x8] sm:$0xff]
    %v139 = vld [vmem:[%s3 + $0x10] sm:$0xff]
    %v140 = vld [vmem:[%s3 + $0x18] sm:$0xff]
    %v141 = vld [vmem:[%s3 + $0x20] sm:$0xff]
    %v142 = vld [vmem:[%s3 + $0x28] sm:$0xff]
    %v143 = vld [vmem:[%s3 + $0x30] sm:$0xff]
    %v144 = vld [vmem:[%s3 + $0x38] sm:$0xff]
    %v145 = vld [vmem:[%s3 + $0x40] sm:$0xff]
    %v146 = vld [vmem:[%s3 + $0x48] sm:$0xff]
    %v147 = vld [vmem:[%s3 + $0x50] sm:$0xff]
    %v148 = vld [vmem:[%s3 + $0x58] sm:$0xff]
    %v149 = vld [vmem:[%s3 + $0x60] sm:$0xff]
    %v150 = vld [vmem:[%s3 + $0x68] sm:$0xff]
    %v151 = vld [vmem:[%s3 + $0x70] sm:$0xff]
    %v152 = vld [vmem:[%s3 + $0x78] sm:$0xff]
    %v153 = vld [vmem:[#allocation4] sm:$0x1]
    %v155 = vlaneseq
    %v156 = vshrl.u32 %v155, 7
    %v157 = vsub.s32 0, %v156
    %v158 = vrot.slane %v153, %v157
    %160 = vmatprep.subr.mxu0 0.0
    %161 = vmatpush1.msra.mxu0 %v152
    %162 = vmatprep.subr.mxu0 0.0
    %163 = vmatpush1.msra.mxu0 %v151
    %164 = vmatprep.subr.mxu0 0.0
    %165 = vmatpush1.msra.mxu0 %v150
    %166 = vmatprep.subr.mxu0 0.0
    %167 = vmatpush1.msra.mxu0 %v149
    %168 = vmatprep.subr.mxu0 0.0
    %169 = vmatpush1.msra.mxu0 %v148
    %170 = vmatprep.subr.mxu0 0.0
    %171 = vmatpush1.msra.mxu0 %v147
    %172 = vmatprep.subr.mxu0 0.0
    %173 = vmatpush1.msra.mxu0 %v146
    %174 = vmatprep.subr.mxu0 0.0
    %175 = vmatpush1.msra.mxu0 %v145
    %176 = vmatprep.subr.mxu0 0.0
    %177 = vmatpush1.msra.mxu0 %v144
    %178 = vmatprep.subr.mxu0 0.0
    %179 = vmatpush1.msra.mxu0 %v143
    %180 = vmatprep.subr.mxu0 0.0
    %181 = vmatpush1.msra.mxu0 %v142
    %182 = vmatprep.subr.mxu0 0.0
    %183 = vmatpush1.msra.mxu0 %v141
    %184 = vmatprep.subr.mxu0 0.0
    %185 = vmatpush1.msra.mxu0 %v140
    %186 = vmatprep.subr.mxu0 0.0
    %187 = vmatpush1.msra.mxu0 %v139
    %188 = vmatprep.subr.mxu0 0.0
    %189 = vmatpush1.msra.mxu0 %v138
    %190 = vmatprep.subr.mxu0 0.0
    %191 = vmatpush1.msra.mxu0 %v137
    %192 = vmatprep.subr.mxu0 0.0
    %193 = vmatpush2.msra.mxu0 0.0
    %194 = vmatprep.subr.mxu0 0.0
    %195 = vmatpush2.msra.mxu0 0.0
    %196 = vmatprep.subr.mxu0 0.0
    %197 = vmatpush2.msra.mxu0 0.0
    %198 = vmatprep.subr.mxu0 0.0
    %199 = vmatpush2.msra.mxu0 0.0
    %200 = vmatprep.subr.mxu0 0.0
    %201 = vmatpush2.msra.mxu0 0.0
    %202 = vmatprep.subr.mxu0 0.0
    %203 = vmatpush2.msra.mxu0 0.0
    %204 = vmatprep.subr.mxu0 0.0
    %205 = vmatpush2.msra.mxu0 0.0
    %206 = vmatprep.subr.mxu0 0.0
    %207 = vmatpush2.msra.mxu0 0.0
    %208 = vmatprep.subr.mxu0 0.0
    %209 = vmatpush2.msra.mxu0 0.0
    %210 = vmatprep.subr.mxu0 0.0
    %211 = vmatpush2.msra.mxu0 0.0
    %212 = vmatprep.subr.mxu0 0.0
    %213 = vmatpush2.msra.mxu0 0.0
    %214 = vmatprep.subr.mxu0 0.0
    %215 = vmatpush2.msra.mxu0 0.0
    %216 = vmatprep.subr.mxu0 0.0
    %217 = vmatpush2.msra.mxu0 0.0
    %218 = vmatprep.subr.mxu0 0.0
    %219 = vmatpush2.msra.mxu0 0.0
    %220 = vmatprep.subr.mxu0 0.0
    %221 = vmatpush2.msra.mxu0 0.0
    %222 = vmatprep.subr.mxu0 0.0
    %223 = vmatpush2.msra.mxu0 0.0
    %224 = vmatprep.mubr.f32.mxu0 0.0
    %225 = vmatmul.mubr.f32.gmra.mxu0 %v136
    %v226 = vpop.f32.mrf.mxu0
    %v227 = vadd.f32 %v158, %v226
    %v228 = vpop.f32.mrf.mxu0
    %229 = vdwg.mxu0
    %v230 = vmax.f32 %v227, 0.0
    %v231 = vld [vmem:[%s5] sm:$0xff]
    %v232 = vld [vmem:[%s5 + $0x8] sm:$0xff]
    %v233 = vld [vmem:[%s5 + $0x10] sm:$0xff]
    %v234 = vld [vmem:[%s5 + $0x18] sm:$0xff]
    %v235 = vld [vmem:[%s5 + $0x20] sm:$0xff]
    %v236 = vld [vmem:[%s5 + $0x28] sm:$0xff]
    %v237 = vld [vmem:[%s5 + $0x30] sm:$0xff]
    %v238 = vld [vmem:[%s5 + $0x38] sm:$0xff]
    %v239 = vld [vmem:[%s5 + $0x40] sm:$0xff]
    %v240 = vld [vmem:[%s5 + $0x48] sm:$0xff]
    %v241 = vld [vmem:[%s5 + $0x50] sm:$0xff]
    %v242 = vld [vmem:[%s5 + $0x58] sm:$0xff]
    %v243 = vld [vmem:[%s5 + $0x60] sm:$0xff]
    %v244 = vld [vmem:[%s5 + $0x68] sm:$0xff]
    %v245 = vld [vmem:[%s5 + $0x70] sm:$0xff]
    %v246 = vld [vmem:[%s5 + $0x78] sm:$0xff]
    %v247 = vld [vmem:[%s6] sm:$0x1]
    %v249 = vlaneseq
    %v250 = vshrl.u32 %v249, 7
    %v251 = vsub.s32 0, %v250
    %v252 = vrot.slane %v247, %v251
    %254 = vmatprep.subr.mxu0 0.0
    %255 = vmatpush1.msra.mxu0 %v246
    %256 = vmatprep.subr.mxu0 0.0
    %257 = vmatpush1.msra.mxu0 %v245
    %258 = vmatprep.subr.mxu0 0.0
    %259 = vmatpush1.msra.mxu0 %v244
    %260 = vmatprep.subr.mxu0 0.0
    %261 = vmatpush1.msra.mxu0 %v243
    %262 = vmatprep.subr.mxu0 0.0
    %263 = vmatpush1.msra.mxu0 %v242
    %264 = vmatprep.subr.mxu0 0.0
    %265 = vmatpush1.msra.mxu0 %v241
    %266 = vmatprep.subr.mxu0 0.0
    %267 = vmatpush1.msra.mxu0 %v240
    %268 = vmatprep.subr.mxu0 0.0
    %269 = vmatpush1.msra.mxu0 %v239
    %270 = vmatprep.subr.mxu0 0.0
    %271 = vmatpush1.msra.mxu0 %v238
    %272 = vmatprep.subr.mxu0 0.0
    %273 = vmatpush1.msra.mxu0 %v237
    %274 = vmatprep.subr.mxu0 0.0
    %275 = vmatpush1.msra.mxu0 %v236
    %276 = vmatprep.subr.mxu0 0.0
    %277 = vmatpush1.msra.mxu0 %v235
    %278 = vmatprep.subr.mxu0 0.0
    %279 = vmatpush1.msra.mxu0 %v234
    %280 = vmatprep.subr.mxu0 0.0
    %281 = vmatpush1.msra.mxu0 %v233
    %282 = vmatprep.subr.mxu0 0.0
    %283 = vmatpush1.msra.mxu0 %v232
    %284 = vmatprep.subr.mxu0 0.0
    %285 = vmatpush1.msra.mxu0 %v231
    %286 = vmatprep.subr.mxu0 0.0
    %287 = vmatpush2.msra.mxu0 0.0
    %288 = vmatprep.subr.mxu0 0.0
    %289 = vmatpush2.msra.mxu0 0.0
    %290 = vmatprep.subr.mxu0 0.0
    %291 = vmatpush2.msra.mxu0 0.0
    %292 = vmatprep.subr.mxu0 0.0
    %293 = vmatpush2.msra.mxu0 0.0
    %294 = vmatprep.subr.mxu0 0.0
    %295 = vmatpush2.msra.mxu0 0.0
    %296 = vmatprep.subr.mxu0 0.0
    %297 = vmatpush2.msra.mxu0 0.0
    %298 = vmatprep.subr.mxu0 0.0
    %299 = vmatpush2.msra.mxu0 0.0
    %300 = vmatprep.subr.mxu0 0.0
    %301 = vmatpush2.msra.mxu0 0.0
    %302 = vmatprep.subr.mxu0 0.0
    %303 = vmatpush2.msra.mxu0 0.0
    %304 = vmatprep.subr.mxu0 0.0
    %305 = vmatpush2.msra.mxu0 0.0
    %306 = vmatprep.subr.mxu0 0.0
    %307 = vmatpush2.msra.mxu0 0.0
    %308 = vmatprep.subr.mxu0 0.0
    %309 = vmatpush2.msra.mxu0 0.0
    %310 = vmatprep.subr.mxu0 0.0
    %311 = vmatpush2.msra.mxu0 0.0
    %312 = vmatprep.subr.mxu0 0.0
    %313 = vmatpush2.msra.mxu0 0.0
    %314 = vmatprep.subr.mxu0 0.0
    %315 = vmatpush2.msra.mxu0 0.0
    %316 = vmatprep.subr.mxu0 0.0
    %317 = vmatpush2.msra.mxu0 0.0
    %318 = vmatprep.mubr.f32.mxu0 0.0
    %319 = vmatmul.mubr.f32.gmra.mxu0 %v230
    %v320 = vpop.f32.mrf.mxu0
    %v321 = vadd.f32 %v252, %v320
    %v322 = vpop.f32.mrf.mxu0
    %323 = vdwg.mxu0
    %vm324 = vcmask 31744
    %325 = vst.msk [vmem:[%s7] sm:$0xff] %vm324, %v321
    // Predicated region
    $region38: #{tpu_custom_call.1} parent=1 // pred_check
      _
    $region39: #{tpu_custom_call.1} parent=1 // pred_check_branch
      %327 = sbr.rel (0) target = $region41
    $region40: #{tpu_custom_call.1} parent=1 // pred_region
      _
    $region41: #{tpu_custom_call.1} parent=1 // pred_fallthru
      _
    // Predicated region
    $region42: #{tpu_custom_call.1} parent=1 // pred_check
      _
    $region43: #{tpu_custom_call.1} parent=1 // pred_check_branch
      %329 = sbr.rel (0) target = $region45
    $region44: #{tpu_custom_call.1} parent=1 // pred_region
      _
    $region45: #{tpu_custom_call.1} parent=1 // pred_fallthru
      _
    %330 = vsyncpa [#allocation3], 1
    %331 = vsyncpa [#allocation5], 1

</llo_original>
